<compile_context>
chip_gen: v5e
topology: v5e:2x2
jax: 0.10.0
libtpu: 0.0.40
codegen_flags: <defaults>
</compile_context>

<pallas_src>
import jax
import jax.numpy as jnp
from jax import lax
from jax.experimental import pallas as pl
from jax.experimental.pallas import tpu as pltpu

LANE = 128  # TPU lane width; every gate / head slot is padded to this.


def decoder_kernel(state_ref, wgru_ref, wheads_ref, bias_ref, out_ref):
    """One decode step.

    Layouts (all f32, tile-aligned):
      state_ref : [B, 2*LANE]  lane0=eid(as f32), lane1=rate, lanes LANE:2*LANE = h (zero-padded)
      wgru_ref  : [2*LANE, 4*LANE]  rows 0:LANE <-> padded emb, rows LANE:2*LANE <-> padded h;
                  128-lane gate slots: [ i_r+h_r | i_z+h_z | i_n | h_n ]
      wheads_ref: [4*LANE, LANE]  rows 0:LANE = padded embedding table,
                  rows LANE:2*LANE = pre_eid W^T (padded), rows 2*LANE:4*LANE = fused pre_rate_1 W^T
      bias_ref  : [8, 4*LANE]  row0=GRU rate column, row1=GRU bias, row2=pre_eid bias,
                  row3=pre_rate_1 bias, row4=pre_rate_2 weight row, row5 lane0=pre_rate_2 bias
      out_ref   : [B, 3*LANE]  [ logp | h_new(padded) | sigmoid(rate) broadcast ]
    """
    B = state_ref.shape[0]

    eid_f = state_ref[:, 0:1]                               # [B, 1]
    rate = state_ref[:, 1:2]                                # [B, 1]
    h = state_ref[:, LANE:2 * LANE]                         # [B, 128] (zeros past H)

    ids = lax.broadcasted_iota(jnp.int32, (B, LANE), 1).astype(jnp.float32)

    # --- embedding(eid) via one-hot @ table (gather-free, MXU) ---
    emb_tab = wheads_ref[0:LANE, :]                          # [128, 128]
    onehot = (ids == eid_f).astype(jnp.float32)
    emb = jnp.dot(onehot, emb_tab, preferred_element_type=jnp.float32)    # [B, 128]

    # --- fused GRU cell: single MXU pass produces (i_r+h_r, i_z+h_z, i_n, h_n) ---
    lhs = jnp.concatenate([emb, h], axis=1)                  # [B, 256] (tile-aligned concat)
    g = jnp.dot(lhs, wgru_ref[...], preferred_element_type=jnp.float32)   # [B, 512]
    g = g + rate * bias_ref[0:1, :] + bias_ref[1:2, :]
    r = jax.nn.sigmoid(g[:, 0:LANE])
    z = jax.nn.sigmoid(g[:, LANE:2 * LANE])
    n = jnp.tanh(g[:, 2 * LANE:3 * LANE] + r * g[:, 3 * LANE:4 * LANE])
    h_new = (1.0 - z) * n + z * h                            # [B, 128]; padded lanes stay 0

    # --- pre_eid logits + log_softmax ---
    w_eid = wheads_ref[LANE:2 * LANE, :]
    logits = (jnp.dot(h_new, w_eid, preferred_element_type=jnp.float32)
              + bias_ref[2:3, 0:LANE])                       # [B, 128]
    m = jnp.max(logits, axis=1, keepdims=True)
    shifted = logits - m

    # argmax on logits (same result as on logp), ties -> FIRST max index;
    # independent of the exp/log chain below so the rate head can overlap it.
    amax = jnp.min(jnp.where(shifted < 0.0, jnp.float32(LANE), ids),
                   axis=1, keepdims=True)                    # [B, 1]

    lse = jnp.log(jnp.sum(jnp.exp(shifted), axis=1, keepdims=True))
    out_ref[:, 0:LANE] = shifted - lse                       # log_softmax
    out_ref[:, LANE:2 * LANE] = h_new

    # --- argmax -> embedding -> fused pre_rate head ---
    # TODO(synk): nn.Dropout treated as identity (eval/inference semantics).
    onehot2 = (ids == amax).astype(jnp.float32)
    emb2 = jnp.dot(onehot2, emb_tab, preferred_element_type=jnp.float32)  # [B, 128]
    lhs2 = jnp.concatenate([emb2, h_new], axis=1)            # [B, 256]
    w_r1 = wheads_ref[2 * LANE:4 * LANE, :]
    pr1 = jnp.maximum(
        jnp.dot(lhs2, w_r1, preferred_element_type=jnp.float32)
        + bias_ref[3:4, 0:LANE], 0.0)                        # [B, 128]
    pr2 = (jnp.sum(pr1 * bias_ref[4:5, 0:LANE], axis=1, keepdims=True)
           + bias_ref[5:6, 0:1])                             # [B, 1]
    out_ref[:, 2 * LANE:3 * LANE] = jnp.broadcast_to(jax.nn.sigmoid(pr2), (B, LANE))


def pack_params(p):
    """Repack PyTorch-layout params into lane-padded slabs (hoist out of decode loops)."""
    f32 = jnp.float32
    emb_tab = p["embedding"].astype(f32)          # [E, D]
    E, D = emb_tab.shape
    H = p["w_hh"].shape[1]
    assert E <= LANE and D <= LANE and H <= LANE, (
        "demo packing assumes E, D, H <= 128")
    assert p["w_ih"].shape[1] == D + 1 and p["w_r2"].shape[0] == 1, "rate_size must be 1"
    # TODO(synk): for large eid_size, tile the E axis (streaming log_softmax) and size
    #             tiles against v7x's 64 MiB VMEM.

    w_ih = p["w_ih"].astype(f32)                  # [3H, D+1]
    w_hh = p["w_hh"].astype(f32)                  # [3H, H]
    b_ih = p["b_ih"].astype(f32)
    b_hh = p["b_hh"].astype(f32)
    wih_e = w_ih[:, :D]                           # [3H, D]
    wih_r = w_ih[:, D]                            # [3H]  (rate column)

    # Fused GRU weight [2*LANE, 4*LANE]; gate slots: [r | z | i_n | h_n].
    wgru = jnp.zeros((2 * LANE, 4 * LANE), f32)
    wgru = wgru.at[0:D, 0:H].set(wih_e[0:H].T)
    wgru = wgru.at[0:D, LANE:LANE + H].set(wih_e[H:2 * H].T)
    wgru = wgru.at[0:D, 2 * LANE:2 * LANE + H].set(wih_e[2 * H:3 * H].T)
    wgru = wgru.at[LANE:LANE + H, 0:H].set(w_hh[0:H].T)
    wgru = wgru.at[LANE:LANE + H, LANE:LANE + H].set(w_hh[H:2 * H].T)
    wgru = wgru.at[LANE:LANE + H, 3 * LANE:3 * LANE + H].set(w_hh[2 * H:3 * H].T)

    # Heads slab [4*LANE, LANE]: emb table | pre_eid W^T | fused pre_rate_1 W^T.
    w_eid = p["w_eid"].astype(f32)                # [E, H]
    w_r1 = p["w_r1"].astype(f32)                  # [H, D+H]  (cols: emb2 then h)
    heads = jnp.zeros((4 * LANE, LANE), f32)
    heads = heads.at[0:E, 0:D].set(emb_tab)
    heads = heads.at[LANE:LANE + H, 0:E].set(w_eid.T)
    heads = heads.at[2 * LANE:2 * LANE + D, 0:H].set(w_r1[:, 0:D].T)
    heads = heads.at[3 * LANE:3 * LANE + H, 0:H].set(w_r1[:, D:D + H].T)

    # Bias slab [8, 4*LANE].
    bias = jnp.zeros((8, 4 * LANE), f32)
    bias = bias.at[0, 0:H].set(wih_r[0:H])
    bias = bias.at[0, LANE:LANE + H].set(wih_r[H:2 * H])
    bias = bias.at[0, 2 * LANE:2 * LANE + H].set(wih_r[2 * H:3 * H])
    bias = bias.at[1, 0:H].set(b_ih[0:H] + b_hh[0:H])
    bias = bias.at[1, LANE:LANE + H].set(b_ih[H:2 * H] + b_hh[H:2 * H])
    bias = bias.at[1, 2 * LANE:2 * LANE + H].set(b_ih[2 * H:3 * H])
    bias = bias.at[1, 3 * LANE:3 * LANE + H].set(b_hh[2 * H:3 * H])
    bias = bias.at[2, 0:LANE].set(jnp.full((LANE,), -1e30, f32))   # mask padded vocab lanes
    bias = bias.at[2, 0:E].set(p["b_eid"].astype(f32))
    bias = bias.at[3, 0:H].set(p["b_r1"].astype(f32))
    bias = bias.at[4, 0:H].set(p["w_r2"].astype(f32)[0])
    bias = bias.at[5, 0].set(p["b_r2"].astype(f32)[0])

    return {"w_gru": wgru, "w_heads": heads, "bias": bias, "E": E, "D": D, "H": H}


def decoder_multi_forward(eid, rate, hidden, packed):
    """eid: int32 [B]; rate: f32 [B]; hidden: f32 [1, B, H].

    Returns (pre_eid_1 [B, E], pre_rate_3 [B], hidden [1, B, H]) like the PyTorch forward.
    """
    E, H = packed["E"], packed["H"]
    B = eid.shape[0]

    # Merge eid / rate / hidden into one [B, 2*LANE] operand (single small DMA).
    state = jnp.zeros((B, 2 * LANE), jnp.float32)
    state = state.at[:, 0].set(eid.astype(jnp.float32))
    state = state.at[:, 1].set(rate.astype(jnp.float32))
    state = state.at[:, LANE:LANE + H].set(hidden[0].astype(jnp.float32))

    vmem = pl.BlockSpec(memory_space=pltpu.MemorySpace.VMEM)
    out = pl.pallas_call(
        decoder_kernel,
        out_shape=jax.ShapeDtypeStruct((B, 3 * LANE), jnp.float32),
        in_specs=[vmem, vmem, vmem, vmem],
        out_specs=vmem,
    )(state, packed["w_gru"], packed["w_heads"], packed["bias"])

    logp = out[:, 0:E]
    h_new = out[:, LANE:LANE + H]
    prate = out[:, 2 * LANE]
    return logp, prate, h_new[None, :, :]


def reference_forward(eid, rate, hidden, p):
    """Pure-JAX reference mirroring the PyTorch forward (dropout = identity)."""
    emb_tab = p["embedding"]
    H = p["w_hh"].shape[1]
    x = jnp.concatenate([emb_tab[eid], rate[:, None]], axis=1)    # [B, D+1]
    h = hidden[0]
    gi = x @ p["w_ih"].T + p["b_ih"]
    gh = h @ p["w_hh"].T + p["b_hh"]
    r = jax.nn.sigmoid(gi[:, :H] + gh[:, :H])
    z = jax.nn.sigmoid(gi[:, H:2 * H] + gh[:, H:2 * H])
    n = jnp.tanh(gi[:, 2 * H:] + r * gh[:, 2 * H:])
    h_new = (1.0 - z) * n + z * h
    logits = h_new @ p["w_eid"].T + p["b_eid"]
    logp = jax.nn.log_softmax(logits, axis=1)
    amax = jnp.argmax(logp, axis=1)
    cat2 = jnp.concatenate([emb_tab[amax], h_new], axis=1)
    pr1 = cat2 @ p["w_r1"].T + p["b_r1"]
    pr2 = jax.nn.relu(pr1) @ p["w_r2"].T + p["b_r2"]
    return logp, jax.nn.sigmoid(pr2[:, 0]), h_new[None, :, :]


def init_params(key, eid_size, rate_size, emb_dim, hidden_dim):
    ks = jax.random.split(key, 12)
    s = 0.1
    return {
        "embedding": s * jax.random.normal(ks[0], (eid_size, emb_dim), jnp.float32),
        "w_ih": s * jax.random.normal(ks[1], (3 * hidden_dim, emb_dim + rate_size), jnp.float32),
        "w_hh": s * jax.random.normal(ks[2], (3 * hidden_dim, hidden_dim), jnp.float32),
        "b_ih": s * jax.random.normal(ks[3], (3 * hidden_dim,), jnp.float32),
        "b_hh": s * jax.random.normal(ks[4], (3 * hidden_dim,), jnp.float32),
        "w_eid": s * jax.random.normal(ks[5], (eid_size, hidden_dim), jnp.float32),
        "b_eid": s * jax.random.normal(ks[6], (eid_size,), jnp.float32),
        "w_r1": s * jax.random.normal(ks[7], (hidden_dim, hidden_dim + emb_dim), jnp.float32),
        "b_r1": s * jax.random.normal(ks[8], (hidden_dim,), jnp.float32),
        "w_r2": s * jax.random.normal(ks[9], (rate_size, hidden_dim), jnp.float32),
        "b_r2": s * jax.random.normal(ks[10], (rate_size,), jnp.float32),
    }


if __name__ == "__main__":
    B = 8
    EID_SIZE = 128
    RATE_SIZE = 1      # rate.reshape(1, -1, 1) in the PyTorch code implies rate_size == 1
    EMB_DIM = 32
    HIDDEN = 64

    key = jax.random.PRNGKey(0)
    kp, ke, kr, kh = jax.random.split(key, 4)
    params = init_params(kp, EID_SIZE, RATE_SIZE, EMB_DIM, HIDDEN)

    eid = jax.random.randint(ke, (B,), 0, EID_SIZE, dtype=jnp.int32)
    rate = jax.random.uniform(kr, (B,), jnp.float32)
    hidden = 0.1 * jax.random.normal(kh, (1, B, HIDDEN), jnp.float32)

    packed = pack_params(params)   # hoistable: pack once, reuse across decode steps
    logp, prate, h_new = decoder_multi_forward(eid, rate, hidden, packed)
    jax.block_until_ready((logp, prate, h_new))

    # Sanity-check against a pure-JAX reference.
    logp_r, prate_r, h_r = reference_forward(eid, rate, hidden, params)
    assert jnp.allclose(logp, logp_r, atol=1e-4, rtol=1e-4)
    assert jnp.allclose(prate, prate_r, atol=1e-4, rtol=1e-4)
    assert jnp.allclose(h_new, h_r, atol=1e-4, rtol=1e-4)

    print("KERNEL_OK")
</pallas_src>

<mosaic_0001>
module attributes {stable_mosaic.version = 11 : i64} {
  func.func @decoder_kernel(%arg0: memref<8x256xf32, #tpu.memory_space<vmem>>, %arg1: memref<256x512xf32, #tpu.memory_space<vmem>>, %arg2: memref<512x128xf32, #tpu.memory_space<vmem>>, %arg3: memref<8x512xf32, #tpu.memory_space<vmem>>, %arg4: memref<8x384xf32, #tpu.memory_space<vmem>>) attributes {dimension_semantics = [], scalar_prefetch = 0 : i64, scratch_operands = 0 : i64, tpu.core_type = #tpu.core_type<tc>} {
    %c0 = arith.constant 0 : index
    %c0_0 = arith.constant 0 : index
    %0 = vector.load %arg0[%c0, %c0_0] : memref<8x256xf32, #tpu.memory_space<vmem>>, vector<8x1xf32>
    %c0_1 = arith.constant 0 : index
    %c1 = arith.constant 1 : index
    %1 = vector.load %arg0[%c0_1, %c1] : memref<8x256xf32, #tpu.memory_space<vmem>>, vector<8x1xf32>
    %c0_2 = arith.constant 0 : index
    %c128 = arith.constant 128 : index
    %2 = vector.load %arg0[%c0_2, %c128] : memref<8x256xf32, #tpu.memory_space<vmem>>, vector<8x128xf32>
    %3 = tpu.iota {dimensions = array<i32: 1>} : vector<8x128xi32>
    %4 = arith.sitofp %3 : vector<8x128xi32> to vector<8x128xf32>
    %c0_3 = arith.constant 0 : index
    %c0_4 = arith.constant 0 : index
    %5 = vector.load %arg2[%c0_3, %c0_4] : memref<512x128xf32, #tpu.memory_space<vmem>>, vector<128x128xf32>
    %6 = vector.broadcast %0 : vector<8x1xf32> to vector<8x128xf32>
    %7 = arith.cmpf oeq, %4, %6 : vector<8x128xf32>
    %8 = arith.extui %7 : vector<8x128xi1> to vector<8x128xi32>
    %9 = arith.sitofp %8 : vector<8x128xi32> to vector<8x128xf32>
    %cst = arith.constant dense<0.000000e+00> : vector<8x128xf32>
    %10 = tpu.matmul %9, %5, %cst {dimension_numbers = #tpu.dot_dimension_numbers<[1], [0], [0], [1], [0, 0, 1, 1], [], []>} : vector<8x128xf32>, vector<128x128xf32>, vector<8x128xf32> -> vector<8x128xf32>
    %11 = tpu.concatenate %10, %2 in 1 : vector<8x128xf32>, vector<8x128xf32> -> vector<8x256xf32>
    %c0_5 = arith.constant 0 : index
    %c0_6 = arith.constant 0 : index
    %12 = vector.load %arg1[%c0_5, %c0_6] : memref<256x512xf32, #tpu.memory_space<vmem>>, vector<256x512xf32>
    %cst_7 = arith.constant dense<0.000000e+00> : vector<8x512xf32>
    %13 = tpu.matmul %11, %12, %cst_7 {dimension_numbers = #tpu.dot_dimension_numbers<[1], [0], [0], [1], [0, 0, 1, 1], [], []>} : vector<8x256xf32>, vector<256x512xf32>, vector<8x512xf32> -> vector<8x512xf32>
    %c0_8 = arith.constant 0 : index
    %c0_9 = arith.constant 0 : index
    %14 = vector.load %arg3[%c0_8, %c0_9] : memref<8x512xf32, #tpu.memory_space<vmem>>, vector<1x512xf32>
    %15 = vector.broadcast %1 : vector<8x1xf32> to vector<8x512xf32>
    %16 = vector.broadcast %14 : vector<1x512xf32> to vector<8x512xf32>
    %17 = arith.mulf %15, %16 : vector<8x512xf32>
    %18 = arith.addf %13, %17 : vector<8x512xf32>
    %c1_10 = arith.constant 1 : index
    %c0_11 = arith.constant 0 : index
    %19 = vector.load %arg3[%c1_10, %c0_11] : memref<8x512xf32, #tpu.memory_space<vmem>>, vector<1x512xf32>
    %20 = vector.broadcast %19 : vector<1x512xf32> to vector<8x512xf32>
    %21 = arith.addf %18, %20 : vector<8x512xf32>
    %22 = vector.extract_strided_slice %21 {offsets = [0, 0], sizes = [8, 128], strides = [1, 1]} : vector<8x512xf32> to vector<8x128xf32>
    %23 = arith.negf %22 : vector<8x128xf32>
    %24 = math.exp %23 : vector<8x128xf32>
    %cst_12 = arith.constant 1.000000e+00 : f32
    %25 = vector.broadcast %cst_12 : f32 to vector<8x128xf32>
    %26 = arith.addf %25, %24 : vector<8x128xf32>
    %27 = arith.divf %25, %26 : vector<8x128xf32>
    %28 = vector.extract_strided_slice %21 {offsets = [0, 128], sizes = [8, 128], strides = [1, 1]} : vector<8x512xf32> to vector<8x128xf32>
    %29 = arith.negf %28 : vector<8x128xf32>
    %30 = math.exp %29 : vector<8x128xf32>
    %cst_13 = arith.constant 1.000000e+00 : f32
    %31 = vector.broadcast %cst_13 : f32 to vector<8x128xf32>
    %32 = arith.addf %31, %30 : vector<8x128xf32>
    %33 = arith.divf %31, %32 : vector<8x128xf32>
    %34 = vector.extract_strided_slice %21 {offsets = [0, 256], sizes = [8, 128], strides = [1, 1]} : vector<8x512xf32> to vector<8x128xf32>
    %35 = vector.extract_strided_slice %21 {offsets = [0, 384], sizes = [8, 128], strides = [1, 1]} : vector<8x512xf32> to vector<8x128xf32>
    %36 = arith.mulf %27, %35 : vector<8x128xf32>
    %37 = arith.addf %34, %36 : vector<8x128xf32>
    %38 = math.tanh %37 : vector<8x128xf32>
    %cst_14 = arith.constant 1.000000e+00 : f32
    %39 = vector.broadcast %cst_14 : f32 to vector<8x128xf32>
    %40 = arith.subf %39, %33 : vector<8x128xf32>
    %41 = arith.mulf %40, %38 : vector<8x128xf32>
    %42 = arith.mulf %33, %2 : vector<8x128xf32>
    %43 = arith.addf %41, %42 : vector<8x128xf32>
    %c128_15 = arith.constant 128 : index
    %c0_16 = arith.constant 0 : index
    %44 = vector.load %arg2[%c128_15, %c0_16] : memref<512x128xf32, #tpu.memory_space<vmem>>, vector<128x128xf32>
    %cst_17 = arith.constant dense<0.000000e+00> : vector<8x128xf32>
    %45 = tpu.matmul %43, %44, %cst_17 {dimension_numbers = #tpu.dot_dimension_numbers<[1], [0], [0], [1], [0, 0, 1, 1], [], []>} : vector<8x128xf32>, vector<128x128xf32>, vector<8x128xf32> -> vector<8x128xf32>
    %c2 = arith.constant 2 : index
    %c0_18 = arith.constant 0 : index
    %46 = vector.load %arg3[%c2, %c0_18] : memref<8x512xf32, #tpu.memory_space<vmem>>, vector<1x128xf32>
    %47 = vector.broadcast %46 : vector<1x128xf32> to vector<8x128xf32>
    %48 = arith.addf %45, %47 : vector<8x128xf32>
    %cst_19 = arith.constant dense<0xFF800000> : vector<8xf32>
    %49 = vector.multi_reduction <maximumf>, %48, %cst_19 [1] : vector<8x128xf32> to vector<8xf32>
    %50 = vector.shape_cast %49 : vector<8xf32> to vector<8x1xf32>
    %51 = vector.broadcast %50 : vector<8x1xf32> to vector<8x128xf32>
    %52 = arith.subf %48, %51 : vector<8x128xf32>
    %cst_20 = arith.constant 0.000000e+00 : f32
    %53 = vector.broadcast %cst_20 : f32 to vector<8x128xf32>
    %54 = arith.cmpf olt, %52, %53 : vector<8x128xf32>
    %cst_21 = arith.constant 1.280000e+02 : f32
    %55 = vector.broadcast %cst_21 : f32 to vector<8x128xf32>
    %56 = arith.select %54, %55, %4 : vector<8x128xi1>, vector<8x128xf32>
    %cst_22 = arith.constant dense<0x7F800000> : vector<8xf32>
    %57 = vector.multi_reduction <minimumf>, %56, %cst_22 [1] : vector<8x128xf32> to vector<8xf32>
    %58 = vector.shape_cast %57 : vector<8xf32> to vector<8x1xf32>
    %59 = math.exp %52 : vector<8x128xf32>
    %cst_23 = arith.constant dense<0.000000e+00> : vector<8xf32>
    %60 = vector.multi_reduction <add>, %59, %cst_23 [1] : vector<8x128xf32> to vector<8xf32>
    %61 = vector.shape_cast %60 : vector<8xf32> to vector<8x1xf32>
    %62 = math.log %61 : vector<8x1xf32>
    %63 = vector.broadcast %62 : vector<8x1xf32> to vector<8x128xf32>
    %64 = arith.subf %52, %63 : vector<8x128xf32>
    %c0_24 = arith.constant 0 : index
    %c0_25 = arith.constant 0 : index
    %65 = vector.load %arg4[%c0_24, %c0_25] : memref<8x384xf32, #tpu.memory_space<vmem>>, vector<8x128xf32>
    tpu.vector_store %arg4[%c0_24, %c0_25], %64 {strides = array<i32>} : memref<8x384xf32, #tpu.memory_space<vmem>>, vector<8x128xf32>,
    %c0_26 = arith.constant 0 : index
    %c128_27 = arith.constant 128 : index
    %66 = vector.load %arg4[%c0_26, %c128_27] : memref<8x384xf32, #tpu.memory_space<vmem>>, vector<8x128xf32>
    tpu.vector_store %arg4[%c0_26, %c128_27], %43 {strides = array<i32>} : memref<8x384xf32, #tpu.memory_space<vmem>>, vector<8x128xf32>,
    %67 = vector.broadcast %58 : vector<8x1xf32> to vector<8x128xf32>
    %68 = arith.cmpf oeq, %4, %67 : vector<8x128xf32>
    %69 = arith.extui %68 : vector<8x128xi1> to vector<8x128xi32>
    %70 = arith.sitofp %69 : vector<8x128xi32> to vector<8x128xf32>
    %cst_28 = arith.constant dense<0.000000e+00> : vector<8x128xf32>
    %71 = tpu.matmul %70, %5, %cst_28 {dimension_numbers = #tpu.dot_dimension_numbers<[1], [0], [0], [1], [0, 0, 1, 1], [], []>} : vector<8x128xf32>, vector<128x128xf32>, vector<8x128xf32> -> vector<8x128xf32>
    %72 = tpu.concatenate %71, %43 in 1 : vector<8x128xf32>, vector<8x128xf32> -> vector<8x256xf32>
    %c256 = arith.constant 256 : index
    %c0_29 = arith.constant 0 : index
    %73 = vector.load %arg2[%c256, %c0_29] : memref<512x128xf32, #tpu.memory_space<vmem>>, vector<256x128xf32>
    %cst_30 = arith.constant dense<0.000000e+00> : vector<8x128xf32>
    %74 = tpu.matmul %72, %73, %cst_30 {dimension_numbers = #tpu.dot_dimension_numbers<[1], [0], [0], [1], [0, 0, 1, 1], [], []>} : vector<8x256xf32>, vector<256x128xf32>, vector<8x128xf32> -> vector<8x128xf32>
    %c3 = arith.constant 3 : index
    %c0_31 = arith.constant 0 : index
    %75 = vector.load %arg3[%c3, %c0_31] : memref<8x512xf32, #tpu.memory_space<vmem>>, vector<1x128xf32>
    %76 = vector.broadcast %75 : vector<1x128xf32> to vector<8x128xf32>
    %77 = arith.addf %74, %76 : vector<8x128xf32>
    %cst_32 = arith.constant 0.000000e+00 : f32
    %78 = vector.broadcast %cst_32 : f32 to vector<8x128xf32>
    %79 = arith.maximumf %77, %78 : vector<8x128xf32>
    %c4 = arith.constant 4 : index
    %c0_33 = arith.constant 0 : index
    %80 = vector.load %arg3[%c4, %c0_33] : memref<8x512xf32, #tpu.memory_space<vmem>>, vector<1x128xf32>
    %81 = vector.broadcast %80 : vector<1x128xf32> to vector<8x128xf32>
    %82 = arith.mulf %79, %81 : vector<8x128xf32>
    %cst_34 = arith.constant dense<0.000000e+00> : vector<8xf32>
    %83 = vector.multi_reduction <add>, %82, %cst_34 [1] : vector<8x128xf32> to vector<8xf32>
    %84 = vector.shape_cast %83 : vector<8xf32> to vector<8x1xf32>
    %c5 = arith.constant 5 : index
    %c0_35 = arith.constant 0 : index
    %85 = vector.load %arg3[%c5, %c0_35] : memref<8x512xf32, #tpu.memory_space<vmem>>, vector<1x1xf32>
    %86 = vector.broadcast %85 : vector<1x1xf32> to vector<8x1xf32>
    %87 = arith.addf %84, %86 : vector<8x1xf32>
    %88 = arith.negf %87 : vector<8x1xf32>
    %89 = math.exp %88 : vector<8x1xf32>
    %cst_36 = arith.constant 1.000000e+00 : f32
    %90 = vector.broadcast %cst_36 : f32 to vector<8x1xf32>
    %91 = arith.addf %90, %89 : vector<8x1xf32>
    %92 = arith.divf %90, %91 : vector<8x1xf32>
    %93 = vector.shape_cast %92 : vector<8x1xf32> to vector<8x1xf32>
    %94 = vector.broadcast %93 : vector<8x1xf32> to vector<8x128xf32>
    %c0_37 = arith.constant 0 : index
    %c256_38 = arith.constant 256 : index
    %95 = vector.load %arg4[%c0_37, %c256_38] : memref<8x384xf32, #tpu.memory_space<vmem>>, vector<8x128xf32>
    tpu.vector_store %arg4[%c0_37, %c256_38], %94 {strides = array<i32>} : memref<8x384xf32, #tpu.memory_space<vmem>>, vector<8x128xf32>,
    return
  }
}

</mosaic_0001>

<llo_original>
// kernel: tpu_custom_call.1
$region0: #{tpu_custom_call.1}
  #allocation0 [shape = 'u32[]', space=smem, size = 0x4, offset = 0x4, fixed_abs, tag = 'smem constant byte address 0x4 - core index']
  #allocation1 [shape = 'u32[72,128]{1,0:T(1,128)}', space=vmem, size = 0x9000, scoped, tag = 'internal scratch']
  %s0 = inlined_call_operand.hbm [shape: f32[8,256], index: 0, kind: input, shape index: {}]
  %s1 = inlined_call_operand.hbm [shape: f32[256,512], index: 1, kind: input, shape index: {}]
  %s2 = inlined_call_operand.hbm [shape: f32[512,128], index: 2, kind: input, shape index: {}]
  %s3 = inlined_call_operand.hbm [shape: f32[8,512], index: 3, kind: input, shape index: {}]
  %s4 = inlined_call_operand.hbm [shape: f32[8,384], index: 4, kind: output, shape index: {}]
  %s5 = sld [smem:[#allocation0]]
  $region42: #{tpu_custom_call.1} parent=0
    _
  %s7 = ssub.s32 1, %s5
  %s8 = scalar_select 0, %s7, %s5
  $region1: #{tpu_custom_call.1} parent=0
    #allocation2 [shape = 'u8[8192]{0}', space=vmem, size = 0x2000, scoped, tag = 'input window, operand 0, single buffered']
    #allocation3 [shape = 's32[1]{0}', space=sflag, size = 0x4, scoped, tag = 'scoped memory for tpu_custom_call.1']
    #allocation4 [shape = 's32[1]{0}', space=sflag, size = 0x4, scoped, tag = 'scoped memory for tpu_custom_call.1']
    #allocation5 [shape = 'u8[524288]{0}', space=vmem, size = 0x80000, scoped, tag = 'input window, operand 1, single buffered']
    #allocation6 [shape = 's32[1]{0}', space=sflag, size = 0x4, scoped, tag = 'scoped memory for tpu_custom_call.1']
    #allocation7 [shape = 'u8[262144]{0}', space=vmem, size = 0x40000, scoped, tag = 'input window, operand 2, single buffered']
    #allocation8 [shape = 'u8[16384]{0}', space=vmem, size = 0x4000, scoped, tag = 'input window, operand 3, single buffered']
    #allocation9 [shape = 's32[1]{0}', space=sflag, size = 0x4, scoped, tag = 'scoped memory for tpu_custom_call.1']
    #allocation10 [shape = 'u8[12288]{0}', space=vmem, size = 0x3000, scoped, tag = 'output window, operand 0, single buffered']
    %9 = vsyncpa [#allocation3], 0
    %10 = vsyncpa [#allocation6], 0
    %11 = vsyncpa [#allocation9], 0
    %12 = vsyncpa [#allocation4], 0
    // Predicated region
    $region2: #{tpu_custom_call.1} parent=1 // pred_check
      _
    $region3: #{tpu_custom_call.1} parent=1 // pred_check_branch
      %14 = sbr.rel (0) target = $region5
    $region4: #{tpu_custom_call.1} parent=1 // pred_region
      %16 = vsyncadd [#allocation3], 0
      %s18 = sshll.u32 %s0, 4
      %s19 = int_to_ptr.hbm [resolvable:$true] %s18
      %s20 = sshll.u32 [#allocation2], 4
      %s21 = int_to_ptr.vmem [resolvable:$true] %s20
      %23 = dma.hbm_to_vmem [thread:$0]  %s19, 256, %s21, [#allocation3]
    $region5: #{tpu_custom_call.1} parent=1 // pred_fallthru
      _
    // Predicated region
    $region6: #{tpu_custom_call.1} parent=1 // pred_check
      _
    $region7: #{tpu_custom_call.1} parent=1 // pred_check_branch
      %25 = sbr.rel (0) target = $region9
    $region8: #{tpu_custom_call.1} parent=1 // pred_region
      %27 = vsyncadd [#allocation6], 0
      %s28 = sshll.u32 %s1, 4
      %s29 = int_to_ptr.hbm [resolvable:$true] %s28
      %s30 = sshll.u32 [#allocation5], 4
      %s31 = int_to_ptr.vmem [resolvable:$true] %s30
      %36 = dma.hbm_to_vmem [thread:$0]  %s29, 16384, %s31, [#allocation6], 512, 512, 32
    $region9: #{tpu_custom_call.1} parent=1 // pred_fallthru
      _
    // Predicated region
    $region10: #{tpu_custom_call.1} parent=1 // pred_check
      _
    $region11: #{tpu_custom_call.1} parent=1 // pred_check_branch
      %38 = sbr.rel (0) target = $region13
    $region12: #{tpu_custom_call.1} parent=1 // pred_region
      %40 = vsyncadd [#allocation6], 0
      %s41 = sshll.u32 %s2, 4
      %s42 = int_to_ptr.hbm [resolvable:$true] %s41
      %s43 = sshll.u32 [#allocation7], 4
      %s44 = int_to_ptr.vmem [resolvable:$true] %s43
      %49 = dma.hbm_to_vmem [thread:$0]  %s42, 8192, %s44, [#allocation6], 128, 128, 8
    $region13: #{tpu_custom_call.1} parent=1 // pred_fallthru
      _
    // Predicated region
    $region14: #{tpu_custom_call.1} parent=1 // pred_check
      _
    $region15: #{tpu_custom_call.1} parent=1 // pred_check_branch
      %51 = sbr.rel (0) target = $region17
    $region16: #{tpu_custom_call.1} parent=1 // pred_region
      %53 = vsyncadd [#allocation9], 0
      %s55 = sshll.u32 %s3, 4
      %s56 = int_to_ptr.hbm [resolvable:$true] %s55
      %s57 = sshll.u32 [#allocation8], 4
      %s58 = int_to_ptr.vmem [resolvable:$true] %s57
      %60 = dma.hbm_to_vmem [thread:$0]  %s56, 512, %s58, [#allocation9]
    $region17: #{tpu_custom_call.1} parent=1 // pred_fallthru
      _
    // Predicated region
    $region18: #{tpu_custom_call.1} parent=1 // pred_check
      _
    $region19: #{tpu_custom_call.1} parent=1 // pred_check_branch
      %62 = sbr.rel (0) target = $region21
    $region20: #{tpu_custom_call.1} parent=1 // pred_region
      %64 = dma.done [#allocation3], 256
    $region21: #{tpu_custom_call.1} parent=1 // pred_fallthru
      _
    // Predicated region
    $region22: #{tpu_custom_call.1} parent=1 // pred_check
      _
    $region23: #{tpu_custom_call.1} parent=1 // pred_check_branch
      %66 = sbr.rel (0) target = $region25
    $region24: #{tpu_custom_call.1} parent=1 // pred_region
      %68 = dma.done [#allocation6], 16384
    $region25: #{tpu_custom_call.1} parent=1 // pred_fallthru
      _
    // Predicated region
    $region26: #{tpu_custom_call.1} parent=1 // pred_check
      _
    $region27: #{tpu_custom_call.1} parent=1 // pred_check_branch
      %70 = sbr.rel (0) target = $region29
    $region28: #{tpu_custom_call.1} parent=1 // pred_region
      %72 = dma.done [#allocation6], 8192
    $region29: #{tpu_custom_call.1} parent=1 // pred_fallthru
      _
    // Predicated region
    $region30: #{tpu_custom_call.1} parent=1 // pred_check
      _
    $region31: #{tpu_custom_call.1} parent=1 // pred_check_branch
      %74 = sbr.rel (0) target = $region33
    $region32: #{tpu_custom_call.1} parent=1 // pred_region
      %76 = dma.done [#allocation9], 512
    $region33: #{tpu_custom_call.1} parent=1 // pred_fallthru
      _
    %v77 = vld [vmem:[#allocation2] sm:$0xff]
    %v78 = vld [vmem:[#allocation2 + $0x8] sm:$0xff]
    %v79 = vlaneseq
    %v80 = vand.u32 %v79, 127
    %v81 = vcvt.s32.f32 %v80
    %v82 = vld [vmem:[#allocation7] sm:$0xff]
    %v83 = vld [vmem:[#allocation7 + $0x8] sm:$0xff]
    %v84 = vld [vmem:[#allocation7 + $0x10] sm:$0xff]
    %v85 = vld [vmem:[#allocation7 + $0x18] sm:$0xff]
    %v86 = vld [vmem:[#allocation7 + $0x20] sm:$0xff]
    %v87 = vld [vmem:[#allocation7 + $0x28] sm:$0xff]
    %v88 = vld [vmem:[#allocation7 + $0x30] sm:$0xff]
    %v89 = vld [vmem:[#allocation7 + $0x38] sm:$0xff]
    %v90 = vld [vmem:[#allocation7 + $0x40] sm:$0xff]
    %v91 = vld [vmem:[#allocation7 + $0x48] sm:$0xff]
    %v92 = vld [vmem:[#allocation7 + $0x50] sm:$0xff]
    %v93 = vld [vmem:[#allocation7 + $0x58] sm:$0xff]
    %v94 = vld [vmem:[#allocation7 + $0x60] sm:$0xff]
    %v95 = vld [vmem:[#allocation7 + $0x68] sm:$0xff]
    %v96 = vld [vmem:[#allocation7 + $0x70] sm:$0xff]
    %v97 = vld [vmem:[#allocation7 + $0x78] sm:$0xff]
    %99 = vset.pattern.permute.xlu0 0
    %100 = vperm.xlu0 %99, %v77
    %v101 = vpop.permute.xlu0 %100
    %vm103 = vcmp.eq.f32.partialorder %v81, %v101
    %v104 = vsel %vm103, 1, 0
    %v105 = vcvt.s32.f32 %v104
    %106 = vmatpush.msra.mxu0 %v97
    %107 = vmatpush.msra.mxu0 %v96
    %108 = vmatpush.msra.mxu0 %v95
    %109 = vmatpush.msra.mxu0 %v94
    %110 = vmatpush.msra.mxu0 %v93
    %111 = vmatpush.msra.mxu0 %v92
    %112 = vmatpush.msra.mxu0 %v91
    %113 = vmatpush.msra.mxu0 %v90
    %114 = vmatpush.msra.mxu0 %v89
    %115 = vmatpush.msra.mxu0 %v88
    %116 = vmatpush.msra.mxu0 %v87
    %117 = vmatpush.msra.mxu0 %v86
    %118 = vmatpush.msra.mxu0 %v85
    %119 = vmatpush.msra.mxu0 %v84
    %120 = vmatpush.msra.mxu0 %v83
    %121 = vmatpush.msra.mxu0 %v82
    %122 = vmatmul.f32.gmra.mxu0 %v105
    %v123 = vpop.f32.mrf.mxu0
    %v124 = vadd.f32 0.0, %v123
    %125 = vdwg.mxu0
    %v126 = vld [vmem:[#allocation5] sm:$0xff]
    %v127 = vld [vmem:[#allocation5 + $0x8] sm:$0xff]
    %v128 = vld [vmem:[#allocation5 + $0x10] sm:$0xff]
    %v129 = vld [vmem:[#allocation5 + $0x18] sm:$0xff]
    %v130 = vld [vmem:[#allocation5 + $0x20] sm:$0xff]
    %v131 = vld [vmem:[#allocation5 + $0x28] sm:$0xff]
    %v132 = vld [vmem:[#allocation5 + $0x30] sm:$0xff]
    %v133 = vld [vmem:[#allocation5 + $0x38] sm:$0xff]
    %v134 = vld [vmem:[#allocation5 + $0x40] sm:$0xff]
    %v135 = vld [vmem:[#allocation5 + $0x48] sm:$0xff]
    %v136 = vld [vmem:[#allocation5 + $0x50] sm:$0xff]
    %v137 = vld [vmem:[#allocation5 + $0x58] sm:$0xff]
    %v138 = vld [vmem:[#allocation5 + $0x60] sm:$0xff]
    %v139 = vld [vmem:[#allocation5 + $0x68] sm:$0xff]
    %v140 = vld [vmem:[#allocation5 + $0x70] sm:$0xff]
    %v141 = vld [vmem:[#allocation5 + $0x78] sm:$0xff]
    %v142 = vld [vmem:[#allocation5 + $0x80] sm:$0xff]
    %v143 = vld [vmem:[#allocation5 + $0x88] sm:$0xff]
    %v144 = vld [vmem:[#allocation5 + $0x90] sm:$0xff]
    %v145 = vld [vmem:[#allocation5 + $0x98] sm:$0xff]
    %v146 = vld [vmem:[#allocation5 + $0xa0] sm:$0xff]
    %v147 = vld [vmem:[#allocation5 + $0xa8] sm:$0xff]
    %v148 = vld [vmem:[#allocation5 + $0xb0] sm:$0xff]
    %v149 = vld [vmem:[#allocation5 + $0xb8] sm:$0xff]
    %v150 = vld [vmem:[#allocation5 + $0xc0] sm:$0xff]
    %v151 = vld [vmem:[#allocation5 + $0xc8] sm:$0xff]
    %v152 = vld [vmem:[#allocation5 + $0xd0] sm:$0xff]
    %v153 = vld [vmem:[#allocation5 + $0xd8] sm:$0xff]
    %v154 = vld [vmem:[#allocation5 + $0xe0] sm:$0xff]
    %v155 = vld [vmem:[#allocation5 + $0xe8] sm:$0xff]
    %v156 = vld [vmem:[#allocation5 + $0xf0] sm:$0xff]
    %v157 = vld [vmem:[#allocation5 + $0xf8] sm:$0xff]
    %v158 = vld [vmem:[#allocation5 + $0x100] sm:$0xff]
    %v159 = vld [vmem:[#allocation5 + $0x108] sm:$0xff]
    %v160 = vld [vmem:[#allocation5 + $0x110] sm:$0xff]
    %v161 = vld [vmem:[#allocation5 + $0x118] sm:$0xff]
    %v162 = vld [vmem:[#allocation5 + $0x120] sm:$0xff]
    %v163 = vld [vmem:[#allocation5 + $0x128] sm:$0xff]
    %v164 = vld [vmem:[#allocation5 + $0x130] sm:$0xff]
    %v165 = vld [vmem:[#allocation5 + $0x138] sm:$0xff]
    %v166 = vld [vmem:[#allocation5 + $0x140] sm:$0xff]
    %v167 = vld [vmem:[#allocation5 + $0x148] sm:$0xff]
    %v168 = vld [vmem:[#allocation5 + $0x150] sm:$0xff]
    %v169 = vld [vmem:[#allocation5 + $0x158] sm:$0xff]
    %v170 = vld [vmem:[#allocation5 + $0x160] sm:$0xff]
    %v171 = vld [vmem:[#allocation5 + $0x168] sm:$0xff]
    %v172 = vld [vmem:[#allocation5 + $0x170] sm:$0xff]
    %v173 = vld [vmem:[#allocation5 + $0x178] sm:$0xff]
    %v174 = vld [vmem:[#allocation5 + $0x180] sm:$0xff]
    %v175 = vld [vmem:[#allocation5 + $0x188] sm:$0xff]
    %v176 = vld [vmem:[#allocation5 + $0x190] sm:$0xff]
    %v177 = vld [vmem:[#allocation5 + $0x198] sm:$0xff]
    %v178 = vld [vmem:[#allocation5 + $0x1a0] sm:$0xff]
    %v179 = vld [vmem:[#allocation5 + $0x1a8] sm:$0xff]
    %v180 = vld [vmem:[#allocation5 + $0x1b0] sm:$0xff]
    %v181 = vld [vmem:[#allocation5 + $0x1b8] sm:$0xff]
    %v182 = vld [vmem:[#allocation5 + $0x1c0] sm:$0xff]
    %v183 = vld [vmem:[#allocation5 + $0x1c8] sm:$0xff]
    %v184 = vld [vmem:[#allocation5 + $0x1d0] sm:$0xff]
    %v185 = vld [vmem:[#allocation5 + $0x1d8] sm:$0xff]
    %v186 = vld [vmem:[#allocation5 + $0x1e0] sm:$0xff]
    %v187 = vld [vmem:[#allocation5 + $0x1e8] sm:$0xff]
    %v188 = vld [vmem:[#allocation5 + $0x1f0] sm:$0xff]
    %v189 = vld [vmem:[#allocation5 + $0x1f8] sm:$0xff]
    %v190 = vld [vmem:[#allocation5 + $0x200] sm:$0xff]
    %v191 = vld [vmem:[#allocation5 + $0x208] sm:$0xff]
    %v192 = vld [vmem:[#allocation5 + $0x210] sm:$0xff]
    %v193 = vld [vmem:[#allocation5 + $0x218] sm:$0xff]
    %v194 = vld [vmem:[#allocation5 + $0x220] sm:$0xff]
    %v195 = vld [vmem:[#allocation5 + $0x228] sm:$0xff]
    %v196 = vld [vmem:[#allocation5 + $0x230] sm:$0xff]
    %v197 = vld [vmem:[#allocation5 + $0x238] sm:$0xff]
    %v198 = vld [vmem:[#allocation5 + $0x240] sm:$0xff]
    %v199 = vld [vmem:[#allocation5 + $0x248] sm:$0xff]
    %v200 = vld [vmem:[#allocation5 + $0x250] sm:$0xff]
    %v201 = vld [vmem:[#allocation5 + $0x258] sm:$0xff]
    %v202 = vld [vmem:[#allocation5 + $0x260] sm:$0xff]
    %v203 = vld [vmem:[#allocation5 + $0x268] sm:$0xff]
    %v204 = vld [vmem:[#allocation5 + $0x270] sm:$0xff]
    %v205 = vld [vmem:[#allocation5 + $0x278] sm:$0xff]
    %v206 = vld [vmem:[#allocation5 + $0x280] sm:$0xff]
    %v207 = vld [vmem:[#allocation5 + $0x288] sm:$0xff]
    %v208 = vld [vmem:[#allocation5 + $0x290] sm:$0xff]
    %v209 = vld [vmem:[#allocation5 + $0x298] sm:$0xff]
    %v210 = vld [vmem:[#allocation5 + $0x2a0] sm:$0xff]
    %v211 = vld [vmem:[#allocation5 + $0x2a8] sm:$0xff]
    %v212 = vld [vmem:[#allocation5 + $0x2b0] sm:$0xff]
    %v213 = vld [vmem:[#allocation5 + $0x2b8] sm:$0xff]
    %v214 = vld [vmem:[#allocation5 + $0x2c0] sm:$0xff]
    %v215 = vld [vmem:[#allocation5 + $0x2c8] sm:$0xff]
    %v216 = vld [vmem:[#allocation5 + $0x2d0] sm:$0xff]
    %v217 = vld [vmem:[#allocation5 + $0x2d8] sm:$0xff]
    %v218 = vld [vmem:[#allocation5 + $0x2e0] sm:$0xff]
    %v219 = vld [vmem:[#allocation5 + $0x2e8] sm:$0xff]
    %v220 = vld [vmem:[#allocation5 + $0x2f0] sm:$0xff]
    %v221 = vld [vmem:[#allocation5 + $0x2f8] sm:$0xff]
    %v222 = vld [vmem:[#allocation5 + $0x300] sm:$0xff]
    %v223 = vld [vmem:[#allocation5 + $0x308] sm:$0xff]
    %v224 = vld [vmem:[#allocation5 + $0x310] sm:$0xff]
    %v225 = vld [vmem:[#allocation5 + $0x318] sm:$0xff]
    %v226 = vld [vmem:[#allocation5 + $0x320] sm:$0xff]
    %v227 = vld [vmem:[#allocation5 + $0x328] sm:$0xff]
    %v228 = vld [vmem:[#allocation5 + $0x330] sm:$0xff]
    %v229 = vld [vmem:[#allocation5 + $0x338] sm:$0xff]
    %v230 = vld [vmem:[#allocation5 + $0x340] sm:$0xff]
    %v231 = vld [vmem:[#allocation5 + $0x348] sm:$0xff]
    %v232 = vld [vmem:[#allocation5 + $0x350] sm:$0xff]
    %v233 = vld [vmem:[#allocation5 + $0x358] sm:$0xff]
    %v234 = vld [vmem:[#allocation5 + $0x360] sm:$0xff]
    %v235 = vld [vmem:[#allocation5 + $0x368] sm:$0xff]
    %v236 = vld [vmem:[#allocation5 + $0x370] sm:$0xff]
    %v237 = vld [vmem:[#allocation5 + $0x378] sm:$0xff]
    %v238 = vld [vmem:[#allocation5 + $0x380] sm:$0xff]
    %v239 = vld [vmem:[#allocation5 + $0x388] sm:$0xff]
    %v240 = vld [vmem:[#allocation5 + $0x390] sm:$0xff]
    %v241 = vld [vmem:[#allocation5 + $0x398] sm:$0xff]
    %v242 = vld [vmem:[#allocation5 + $0x3a0] sm:$0xff]
    %v243 = vld [vmem:[#allocation5 + $0x3a8] sm:$0xff]
    %v244 = vld [vmem:[#allocation5 + $0x3b0] sm:$0xff]
    %v245 = vld [vmem:[#allocation5 + $0x3b8] sm:$0xff]
    %v246 = vld [vmem:[#allocation5 + $0x3c0] sm:$0xff]
    %v247 = vld [vmem:[#allocation5 + $0x3c8] sm:$0xff]
    %v248 = vld [vmem:[#allocation5 + $0x3d0] sm:$0xff]
    %v249 = vld [vmem:[#allocation5 + $0x3d8] sm:$0xff]
    %v250 = vld [vmem:[#allocation5 + $0x3e0] sm:$0xff]
    %v251 = vld [vmem:[#allocation5 + $0x3e8] sm:$0xff]
    %v252 = vld [vmem:[#allocation5 + $0x3f0] sm:$0xff]
    %v253 = vld [vmem:[#allocation5 + $0x3f8] sm:$0xff]
    %v254 = vld [vmem:[#allocation8] ss:$8 sm:$0xf]
    %255 = vset.pattern.permute.xlu0 1
    %256 = vperm.xlu0 %255, %v77
    %v257 = vpop.permute.xlu0 %256
    %v260 = vperm.slane %v254, 0
    %v261 = vperm.slane %v254, 1
    %v262 = vperm.slane %v254, 2
    %v263 = vperm.slane %v254, 3
    %v268 = vmul.f32 %v257, %v260
    %v269 = vmul.f32 %v257, %v261
    %v270 = vmul.f32 %v257, %v262
    %v271 = vmul.f32 %v257, %v263
    %272 = vmatpush.msra.mxu0 %v186
    %273 = vmatpush.msra.mxu0 %v182
    %274 = vmatpush.msra.mxu0 %v178
    %275 = vmatpush.msra.mxu0 %v174
    %276 = vmatpush.msra.mxu0 %v170
    %277 = vmatpush.msra.mxu0 %v166
    %278 = vmatpush.msra.mxu0 %v162
    %279 = vmatpush.msra.mxu0 %v158
    %280 = vmatpush.msra.mxu0 %v154
    %281 = vmatpush.msra.mxu0 %v150
    %282 = vmatpush.msra.mxu0 %v146
    %283 = vmatpush.msra.mxu0 %v142
    %284 = vmatpush.msra.mxu0 %v138
    %285 = vmatpush.msra.mxu0 %v134
    %286 = vmatpush.msra.mxu0 %v130
    %287 = vmatpush.msra.mxu0 %v126
    %288 = vmatmul.f32.gmra.mxu0 %v124
    %v289 = vpop.f32.mrf.mxu0
    %v290 = vadd.f32 %v268, %v289
    %291 = vdwg.mxu0
    %292 = vmatpush.msra.mxu0 %v250
    %293 = vmatpush.msra.mxu0 %v246
    %294 = vmatpush.msra.mxu0 %v242
    %295 = vmatpush.msra.mxu0 %v238
    %296 = vmatpush.msra.mxu0 %v234
    %297 = vmatpush.msra.mxu0 %v230
    %298 = vmatpush.msra.mxu0 %v226
    %299 = vmatpush.msra.mxu0 %v222
    %300 = vmatpush.msra.mxu0 %v218
    %301 = vmatpush.msra.mxu0 %v214
    %302 = vmatpush.msra.mxu0 %v210
    %303 = vmatpush.msra.mxu0 %v206
    %304 = vmatpush.msra.mxu0 %v202
    %305 = vmatpush.msra.mxu0 %v198
    %306 = vmatpush.msra.mxu0 %v194
    %307 = vmatpush.msra.mxu0 %v190
    %308 = vmatmul.f32.gmra.mxu0 %v78
    %v309 = vpop.f32.mrf.mxu0
    %v310 = vadd.f32 %v290, %v309
    %311 = vdwg.mxu0
    %312 = vmatpush.msra.mxu0 %v187
    %313 = vmatpush.msra.mxu0 %v183
    %314 = vmatpush.msra.mxu0 %v179
    %315 = vmatpush.msra.mxu0 %v175
    %316 = vmatpush.msra.mxu0 %v171
    %317 = vmatpush.msra.mxu0 %v167
    %318 = vmatpush.msra.mxu0 %v163
    %319 = vmatpush.msra.mxu0 %v159
    %320 = vmatpush.msra.mxu0 %v155
    %321 = vmatpush.msra.mxu0 %v151
    %322 = vmatpush.msra.mxu0 %v147
    %323 = vmatpush.msra.mxu0 %v143
    %324 = vmatpush.msra.mxu0 %v139
    %325 = vmatpush.msra.mxu0 %v135
    %326 = vmatpush.msra.mxu0 %v131
    %327 = vmatpush.msra.mxu0 %v127
    %328 = vmatmul.f32.gmra.mxu0 %v124
    %v329 = vpop.f32.mrf.mxu0
    %v330 = vadd.f32 %v269, %v329
    %331 = vdwg.mxu0
    %332 = vmatpush.msra.mxu0 %v251
    %333 = vmatpush.msra.mxu0 %v247
    %334 = vmatpush.msra.mxu0 %v243
    %335 = vmatpush.msra.mxu0 %v239
    %336 = vmatpush.msra.mxu0 %v235
    %337 = vmatpush.msra.mxu0 %v231
    %338 = vmatpush.msra.mxu0 %v227
    %339 = vmatpush.msra.mxu0 %v223
    %340 = vmatpush.msra.mxu0 %v219
    %341 = vmatpush.msra.mxu0 %v215
    %342 = vmatpush.msra.mxu0 %v211
    %343 = vmatpush.msra.mxu0 %v207
    %344 = vmatpush.msra.mxu0 %v203
    %345 = vmatpush.msra.mxu0 %v199
    %346 = vmatpush.msra.mxu0 %v195
    %347 = vmatpush.msra.mxu0 %v191
    %348 = vmatmul.f32.gmra.mxu0 %v78
    %v349 = vpop.f32.mrf.mxu0
    %v350 = vadd.f32 %v330, %v349
    %351 = vdwg.mxu0
    %352 = vmatpush.msra.mxu0 %v188
    %353 = vmatpush.msra.mxu0 %v184
    %354 = vmatpush.msra.mxu0 %v180
    %355 = vmatpush.msra.mxu0 %v176
    %356 = vmatpush.msra.mxu0 %v172
    %357 = vmatpush.msra.mxu0 %v168
    %358 = vmatpush.msra.mxu0 %v164
    %359 = vmatpush.msra.mxu0 %v160
    %360 = vmatpush.msra.mxu0 %v156
    %361 = vmatpush.msra.mxu0 %v152
    %362 = vmatpush.msra.mxu0 %v148
    %363 = vmatpush.msra.mxu0 %v144
    %364 = vmatpush.msra.mxu0 %v140
    %365 = vmatpush.msra.mxu0 %v136
    %366 = vmatpush.msra.mxu0 %v132
    %367 = vmatpush.msra.mxu0 %v128
    %368 = vmatmul.f32.gmra.mxu0 %v124
    %v369 = vpop.f32.mrf.mxu0
    %v370 = vadd.f32 %v270, %v369
    %371 = vdwg.mxu0
    %372 = vmatpush.msra.mxu0 %v252
    %373 = vmatpush.msra.mxu0 %v248
    %374 = vmatpush.msra.mxu0 %v244
    %375 = vmatpush.msra.mxu0 %v240
    %376 = vmatpush.msra.mxu0 %v236
    %377 = vmatpush.msra.mxu0 %v232
    %378 = vmatpush.msra.mxu0 %v228
    %379 = vmatpush.msra.mxu0 %v224
    %380 = vmatpush.msra.mxu0 %v220
    %381 = vmatpush.msra.mxu0 %v216
    %382 = vmatpush.msra.mxu0 %v212
    %383 = vmatpush.msra.mxu0 %v208
    %384 = vmatpush.msra.mxu0 %v204
    %385 = vmatpush.msra.mxu0 %v200
    %386 = vmatpush.msra.mxu0 %v196
    %387 = vmatpush.msra.mxu0 %v192
    %388 = vmatmul.f32.gmra.mxu0 %v78
    %v389 = vpop.f32.mrf.mxu0
    %v390 = vadd.f32 %v370, %v389
    %391 = vdwg.mxu0
    %392 = vmatpush.msra.mxu0 %v189
    %393 = vmatpush.msra.mxu0 %v185
    %394 = vmatpush.msra.mxu0 %v181
    %395 = vmatpush.msra.mxu0 %v177
    %396 = vmatpush.msra.mxu0 %v173
    %397 = vmatpush.msra.mxu0 %v169
    %398 = vmatpush.msra.mxu0 %v165
    %399 = vmatpush.msra.mxu0 %v161
    %400 = vmatpush.msra.mxu0 %v157
    %401 = vmatpush.msra.mxu0 %v153
    %402 = vmatpush.msra.mxu0 %v149
    %403 = vmatpush.msra.mxu0 %v145
    %404 = vmatpush.msra.mxu0 %v141
    %405 = vmatpush.msra.mxu0 %v137
    %406 = vmatpush.msra.mxu0 %v133
    %407 = vmatpush.msra.mxu0 %v129
    %408 = vmatmul.f32.gmra.mxu0 %v124
    %v409 = vpop.f32.mrf.mxu0
    %v410 = vadd.f32 %v271, %v409
    %411 = vdwg.mxu0
    %412 = vmatpush.msra.mxu0 %v253
    %413 = vmatpush.msra.mxu0 %v249
    %414 = vmatpush.msra.mxu0 %v245
    %415 = vmatpush.msra.mxu0 %v241
    %416 = vmatpush.msra.mxu0 %v237
    %417 = vmatpush.msra.mxu0 %v233
    %418 = vmatpush.msra.mxu0 %v229
    %419 = vmatpush.msra.mxu0 %v225
    %420 = vmatpush.msra.mxu0 %v221
    %421 = vmatpush.msra.mxu0 %v217
    %422 = vmatpush.msra.mxu0 %v213
    %423 = vmatpush.msra.mxu0 %v209
    %424 = vmatpush.msra.mxu0 %v205
    %425 = vmatpush.msra.mxu0 %v201
    %426 = vmatpush.msra.mxu0 %v197
    %427 = vmatpush.msra.mxu0 %v193
    %428 = vmatmul.f32.gmra.mxu0 %v78
    %v429 = vpop.f32.mrf.mxu0
    %v430 = vadd.f32 %v410, %v429
    %431 = vdwg.mxu0
    %s432 = scalar_lea.vmem [#allocation8], 1
    %v433 = vld [vmem:[%s432] ss:$8 sm:$0xf]
    %v435 = vperm.slane %v433, 0
    %v436 = vperm.slane %v433, 1
    %v437 = vperm.slane %v433, 2
    %v438 = vperm.slane %v433, 3
    %v443 = vadd.f32 %v310, %v435
    %v444 = vadd.f32 %v350, %v436
    %v445 = vadd.f32 %v390, %v437
    %v446 = vadd.f32 %v430, %v438
    %v447 = vxor.u32 %v443, 2147483648
    %v448 = vmul.f32 %v447, 1.442695
    %v449 = vpow.pop %v448
    %v450 = vadd.f32 %v449, 1.0
    %v451 = vrcp.pop %v450
    %v452 = vmul.f32 %v450, %v451
    %v453 = vsub.f32 1.0, %v452
    %v454 = vmul.f32 %v451, %v453
    %v455 = vadd.f32 %v451, %v454
    %vm456 = vweird.f32 %v450
    %vm457 = vweird.f32 %v451
    %vm458 = vmor %vm456, %vm457
    %v459 = vsel %vm458, %v451, %v455
    %v460 = vand.u32 2147483647, %v450
    %vm461 = vcmp.eq.f32.partialorder %v460, 8.507059e+37
    %v462 = vand.u32 %v450, 2147483648
    %v463 = vor.u32 1.1754944e-38, %v462
    %v464 = vsel %vm461, %v463, %v459
    %v465 = vmul.f32 1.0, %v464
    %v466 = vxor.u32 %v444, 2147483648
    %v467 = vmul.f32 %v466, 1.442695
    %v468 = vpow.pop %v467
    %v469 = vadd.f32 %v468, 1.0
    %v470 = vrcp.pop %v469
    %v471 = vmul.f32 %v469, %v470
    %v472 = vsub.f32 1.0, %v471
    %v473 = vmul.f32 %v470, %v472
    %v474 = vadd.f32 %v470, %v473
    %vm475 = vweird.f32 %v469
    %vm476 = vweird.f32 %v470
    %vm477 = vmor %vm475, %vm476
    %v478 = vsel %vm477, %v470, %v474
    %v479 = vand.u32 2147483647, %v469
    %vm480 = vcmp.eq.f32.partialorder %v479, 8.507059e+37
    %v481 = vand.u32 %v469, 2147483648
    %v482 = vor.u32 1.1754944e-38, %v481
    %v483 = vsel %vm480, %v482, %v478
    %v484 = vmul.f32 1.0, %v483
    %v485 = vmul.f32 %v465, %v446
    %v486 = vadd.f32 %v445, %v485
    %v487 = vtanh.pop %v486
    %v488 = vsub.f32 1.0, %v484
    %v489 = vmul.f32 %v488, %v487
    %v490 = vmul.f32 %v484, %v78
    %v491 = vadd.f32 %v489, %v490
    %v492 = vld [vmem:[#allocation7 + $0x80] sm:$0xff]
    %v493 = vld [vmem:[#allocation7 + $0x88] sm:$0xff]
    %v494 = vld [vmem:[#allocation7 + $0x90] sm:$0xff]
    %v495 = vld [vmem:[#allocation7 + $0x98] sm:$0xff]
    %v496 = vld [vmem:[#allocation7 + $0xa0] sm:$0xff]
    %v497 = vld [vmem:[#allocation7 + $0xa8] sm:$0xff]
    %v498 = vld [vmem:[#allocation7 + $0xb0] sm:$0xff]
    %v499 = vld [vmem:[#allocation7 + $0xb8] sm:$0xff]
    %v500 = vld [vmem:[#allocation7 + $0xc0] sm:$0xff]
    %v501 = vld [vmem:[#allocation7 + $0xc8] sm:$0xff]
    %v502 = vld [vmem:[#allocation7 + $0xd0] sm:$0xff]
    %v503 = vld [vmem:[#allocation7 + $0xd8] sm:$0xff]
    %v504 = vld [vmem:[#allocation7 + $0xe0] sm:$0xff]
    %v505 = vld [vmem:[#allocation7 + $0xe8] sm:$0xff]
    %v506 = vld [vmem:[#allocation7 + $0xf0] sm:$0xff]
    %v507 = vld [vmem:[#allocation7 + $0xf8] sm:$0xff]
    %v508 = vld [vmem:[#allocation8 + $0x2] ss:$0 sm:$0xff]
    %509 = vmatpush.msra.mxu0 %v507
    %510 = vmatpush.msra.mxu0 %v506
    %511 = vmatpush.msra.mxu0 %v505
    %512 = vmatpush.msra.mxu0 %v504
    %513 = vmatpush.msra.mxu0 %v503
    %514 = vmatpush.msra.mxu0 %v502
    %515 = vmatpush.msra.mxu0 %v501
    %516 = vmatpush.msra.mxu0 %v500
    %517 = vmatpush.msra.mxu0 %v499
    %518 = vmatpush.msra.mxu0 %v498
    %519 = vmatpush.msra.mxu0 %v497
    %520 = vmatpush.msra.mxu0 %v496
    %521 = vmatpush.msra.mxu0 %v495
    %522 = vmatpush.msra.mxu0 %v494
    %523 = vmatpush.msra.mxu0 %v493
    %524 = vmatpush.msra.mxu0 %v492
    %525 = vmatmul.f32.gmra.mxu0 %v491
    %v526 = vpop.f32.mrf.mxu0
    %v527 = vadd.f32 %v508, %v526
    %528 = vdwg.mxu0
    %529 = vmax.xlane.f32.xlu0 %v527
    %v530 = vpop.xlane.xlu0 %529
    %v531 = vsub.f32 %v527, %v530
    %vm532 = vcmp.lt.f32.partialorder %v531, 0.0
    %v533 = vsel %vm532, 128.0, %v81
    %534 = vmin.xlane.f32.xlu0 %v533
    %v535 = vpop.xlane.xlu0 %534
    %v536 = vmul.f32 %v531, 1.442695
    %v537 = vpow.pop %v536
    %538 = vadd.xlane.f32.xlu0 %v537
    %v539 = vpop.xlane.xlu0 %538
    %v540 = vlog2.pop %v539
    %v541 = vmul.f32 %v540, 0.6931472
    %v542 = vsub.f32 %v531, %v541
    %543 = vst [vmem:[#allocation10] sm:$0xff] %v542
    %544 = vst [vmem:[#allocation10 + $0x8] sm:$0xff] %v491
    %vm545 = vcmp.eq.f32.partialorder %v81, %v535
    %v546 = vsel %vm545, 1, 0
    %v547 = vcvt.s32.f32 %v546
    %548 = vmatpush.msra.mxu0 %v97
    %549 = vmatpush.msra.mxu0 %v96
    %550 = vmatpush.msra.mxu0 %v95
    %551 = vmatpush.msra.mxu0 %v94
    %552 = vmatpush.msra.mxu0 %v93
    %553 = vmatpush.msra.mxu0 %v92
    %554 = vmatpush.msra.mxu0 %v91
    %555 = vmatpush.msra.mxu0 %v90
    %556 = vmatpush.msra.mxu0 %v89
    %557 = vmatpush.msra.mxu0 %v88
    %558 = vmatpush.msra.mxu0 %v87
    %559 = vmatpush.msra.mxu0 %v86
    %560 = vmatpush.msra.mxu0 %v85
    %561 = vmatpush.msra.mxu0 %v84
    %562 = vmatpush.msra.mxu0 %v83
    %563 = vmatpush.msra.mxu0 %v82
    %564 = vmatmul.f32.gmra.mxu0 %v547
    %v565 = vpop.f32.mrf.mxu0
    %v566 = vadd.f32 0.0, %v565
    %567 = vdwg.mxu0
    %v568 = vld [vmem:[#allocation7 + $0x100] sm:$0xff]
    %v569 = vld [vmem:[#allocation7 + $0x108] sm:$0xff]
    %v570 = vld [vmem:[#allocation7 + $0x110] sm:$0xff]
    %v571 = vld [vmem:[#allocation7 + $0x118] sm:$0xff]
    %v572 = vld [vmem:[#allocation7 + $0x120] sm:$0xff]
    %v573 = vld [vmem:[#allocation7 + $0x128] sm:$0xff]
    %v574 = vld [vmem:[#allocation7 + $0x130] sm:$0xff]
    %v575 = vld [vmem:[#allocation7 + $0x138] sm:$0xff]
    %v576 = vld [vmem:[#allocation7 + $0x140] sm:$0xff]
    %v577 = vld [vmem:[#allocation7 + $0x148] sm:$0xff]
    %v578 = vld [vmem:[#allocation7 + $0x150] sm:$0xff]
    %v579 = vld [vmem:[#allocation7 + $0x158] sm:$0xff]
    %v580 = vld [vmem:[#allocation7 + $0x160] sm:$0xff]
    %v581 = vld [vmem:[#allocation7 + $0x168] sm:$0xff]
    %v582 = vld [vmem:[#allocation7 + $0x170] sm:$0xff]
    %v583 = vld [vmem:[#allocation7 + $0x178] sm:$0xff]
    %v584 = vld [vmem:[#allocation7 + $0x180] sm:$0xff]
    %v585 = vld [vmem:[#allocation7 + $0x188] sm:$0xff]
    %v586 = vld [vmem:[#allocation7 + $0x190] sm:$0xff]
    %v587 = vld [vmem:[#allocation7 + $0x198] sm:$0xff]
    %v588 = vld [vmem:[#allocation7 + $0x1a0] sm:$0xff]
    %v589 = vld [vmem:[#allocation7 + $0x1a8] sm:$0xff]
    %v590 = vld [vmem:[#allocation7 + $0x1b0] sm:$0xff]
    %v591 = vld [vmem:[#allocation7 + $0x1b8] sm:$0xff]
    %v592 = vld [vmem:[#allocation7 + $0x1c0] sm:$0xff]
    %v593 = vld [vmem:[#allocation7 + $0x1c8] sm:$0xff]
    %v594 = vld [vmem:[#allocation7 + $0x1d0] sm:$0xff]
    %v595 = vld [vmem:[#allocation7 + $0x1d8] sm:$0xff]
    %v596 = vld [vmem:[#allocation7 + $0x1e0] sm:$0xff]
    %v597 = vld [vmem:[#allocation7 + $0x1e8] sm:$0xff]
    %v598 = vld [vmem:[#allocation7 + $0x1f0] sm:$0xff]
    %v599 = vld [vmem:[#allocation7 + $0x1f8] sm:$0xff]
    %v600 = vld [vmem:[#allocation8 + $0x3] ss:$0 sm:$0xff]
    %601 = vmatpush.msra.mxu0 %v583
    %602 = vmatpush.msra.mxu0 %v582
    %603 = vmatpush.msra.mxu0 %v581
    %604 = vmatpush.msra.mxu0 %v580
    %605 = vmatpush.msra.mxu0 %v579
    %606 = vmatpush.msra.mxu0 %v578
    %607 = vmatpush.msra.mxu0 %v577
    %608 = vmatpush.msra.mxu0 %v576
    %609 = vmatpush.msra.mxu0 %v575
    %610 = vmatpush.msra.mxu0 %v574
    %611 = vmatpush.msra.mxu0 %v573
    %612 = vmatpush.msra.mxu0 %v572
    %613 = vmatpush.msra.mxu0 %v571
    %614 = vmatpush.msra.mxu0 %v570
    %615 = vmatpush.msra.mxu0 %v569
    %616 = vmatpush.msra.mxu0 %v568
    %617 = vmatmul.f32.gmra.mxu0 %v566
    %v618 = vpop.f32.mrf.mxu0
    %v619 = vadd.f32 %v600, %v618
    %620 = vdwg.mxu0
    %621 = vmatpush.msra.mxu0 %v599
    %622 = vmatpush.msra.mxu0 %v598
    %623 = vmatpush.msra.mxu0 %v597
    %624 = vmatpush.msra.mxu0 %v596
    %625 = vmatpush.msra.mxu0 %v595
    %626 = vmatpush.msra.mxu0 %v594
    %627 = vmatpush.msra.mxu0 %v593
    %628 = vmatpush.msra.mxu0 %v592
    %629 = vmatpush.msra.mxu0 %v591
    %630 = vmatpush.msra.mxu0 %v590
    %631 = vmatpush.msra.mxu0 %v589
    %632 = vmatpush.msra.mxu0 %v588
    %633 = vmatpush.msra.mxu0 %v587
    %634 = vmatpush.msra.mxu0 %v586
    %635 = vmatpush.msra.mxu0 %v585
    %636 = vmatpush.msra.mxu0 %v584
    %637 = vmatmul.f32.gmra.mxu0 %v491
    %v638 = vpop.f32.mrf.mxu0
    %v639 = vadd.f32 %v619, %v638
    %640 = vdwg.mxu0
    %v641 = vmax.f32 %v639, 0.0
    %v642 = vld [vmem:[#allocation8 + $0x4] ss:$0 sm:$0xff]
    %v643 = vmul.f32 %v641, %v642
    %644 = vadd.xlane.f32.xlu0 %v643
    %v645 = vpop.xlane.xlu0 %644
    %v646 = vld [vmem:[#allocation8 + $0x5] ss:$0 sm:$0xff]
    %v647 = vadd.f32 %v645, %v646
    %v648 = vxor.u32 %v647, 2147483648
    %v649 = vmul.f32 %v648, 1.442695
    %v650 = vpow.pop %v649
    %v651 = vadd.f32 %v650, 1.0
    %v652 = vrcp.pop %v651
    %v653 = vmul.f32 %v651, %v652
    %v654 = vsub.f32 1.0, %v653
    %v655 = vmul.f32 %v652, %v654
    %v656 = vadd.f32 %v652, %v655
    %vm657 = vweird.f32 %v651
    %vm658 = vweird.f32 %v652
    %vm659 = vmor %vm657, %vm658
    %v660 = vsel %vm659, %v652, %v656
    %v661 = vand.u32 2147483647, %v651
    %vm662 = vcmp.eq.f32.partialorder %v661, 8.507059e+37
    %v663 = vand.u32 %v651, 2147483648
    %v664 = vor.u32 1.1754944e-38, %v663
    %v665 = vsel %vm662, %v664, %v660
    %v666 = vmul.f32 1.0, %v665
    %668 = vset.pattern.permute.xlu0 0
    %669 = vperm.xlu0 %668, %v666
    %v670 = vpop.permute.xlu0 %669
    %672 = vst [vmem:[#allocation10 + $0x10] sm:$0xff] %v670
    // Predicated region
    $region34: #{tpu_custom_call.1} parent=1 // pred_check
      _
    $region35: #{tpu_custom_call.1} parent=1 // pred_check_branch
      %674 = sbr.rel (0) target = $region37
    $region36: #{tpu_custom_call.1} parent=1 // pred_region
      %676 = vsyncadd [#allocation4], 0
      %s678 = sshll.u32 [#allocation10], 4
      %s679 = int_to_ptr.vmem [resolvable:$true] %s678
      %s680 = sshll.u32 %s4, 4
      %s681 = int_to_ptr.hbm [resolvable:$true] %s680
      %683 = dma.vmem_to_hbm [thread:$0]  %s679, 384, %s681, [#allocation4]
    $region37: #{tpu_custom_call.1} parent=1 // pred_fallthru
      _
    // Predicated region
    $region38: #{tpu_custom_call.1} parent=1 // pred_check
      _
    $region39: #{tpu_custom_call.1} parent=1 // pred_check_branch
      %685 = sbr.rel (0) target = $region41
    $region40: #{tpu_custom_call.1} parent=1 // pred_region
      %687 = dma.done [#allocation4], 384
    $region41: #{tpu_custom_call.1} parent=1 // pred_fallthru
      _
    %688 = vsyncpa [#allocation3], 1
    %689 = vsyncpa [#allocation6], 1
    %690 = vsyncpa [#allocation9], 1
    %691 = vsyncpa [#allocation4], 1

</llo_original>
